<compile_context>
chip_gen: v6e
topology: v6e:2x2x1
jax: 0.10.0
libtpu: 0.0.40
codegen_flags: <defaults>
</compile_context>

<pallas_src>
import functools

import jax
import jax.numpy as jnp
from jax.experimental import pallas as pl
from jax.experimental.pallas import tpu as pltpu

LANE = 128                             # lane-dense output slab width
TM_MAX = 1024                          # max rows per batch tile
VMEM_TILE_BUDGET = 40 * 1024 * 1024    # tile-sizing budget (fits v7x 64 MiB)
VMEM_LIMIT_BYTES = 48 * 1024 * 1024    # scoped VMEM limit for the kernel


def _round_up(x, m):
    return (x + m - 1) // m * m


def _round_down(x, m):
    return x // m * m


def _sublane(dtype):
    # f32 -> 8, bf16 -> 16, int8/fp8 -> 32 (sublane packing requirement)
    return 32 // jnp.dtype(dtype).itemsize


def ntm_kernel(ng_ref, doc_ref, w_nt_ref, b_nt_ref, w_dt_ref, b_dt_ref,
               w_tl_ref, b_tl_ref, out_ref):
    """One batch tile of the classification-mode forward pass.

    ng_ref/doc_ref     : [TM, E]   (f32 or bf16 — fed to the MXU as-is)
    w_nt_ref/w_dt_ref  : [E, T],  b_nt_ref/b_dt_ref : [1, T]
    w_tl_ref           : [T, L],  b_tl_ref          : [1, L]
    out_ref            : [TM, 128] slab: lane 0 = score, lanes 1..L = probs.

    NOTE: with a ragged last batch tile, rows beyond B contain garbage; all
    math below is per-row (no batch-axis reduction) and Pallas masks the
    out-of-bounds part of the output store, so those rows never escape.
    Do NOT add a batch-axis reduction here without masking the edge tile.
    """
    l = w_tl_ref.shape[1]

    # ---- Two MXU dots in the native input dtype, f32 accumulation.
    nt_logits = jnp.dot(ng_ref[...], w_nt_ref[...],
                        preferred_element_type=jnp.float32)
    nt_logits = nt_logits + b_nt_ref[...].astype(jnp.float32)

    dt_logits = jnp.dot(doc_ref[...], w_dt_ref[...],
                        preferred_element_type=jnp.float32)
    dt_logits = dt_logits + b_dt_ref[...].astype(jnp.float32)

    # ngram_topic = sigmoid(nt_logits)            (elementwise math in f32)
    ngram_topic = pl.reciprocal(1.0 + jnp.exp(-nt_logits), approx=False)

    # document_topic = softmax(dt_logits, -1)
    m = jnp.max(dt_logits, axis=-1, keepdims=True)
    e = jnp.exp(dt_logits - m)
    document_topic = e * pl.reciprocal(jnp.sum(e, axis=-1, keepdims=True),
                                       approx=False)

    # score = sum(ngram_topic * document_topic, -1)            [TM, 1]
    score = jnp.sum(ngram_topic * document_topic, axis=-1, keepdims=True)

    # label_probs = softmax(document_topic @ w_tl + b_tl, -1)  [TM, L]
    lbl = jnp.dot(document_topic.astype(w_tl_ref.dtype), w_tl_ref[...],
                  preferred_element_type=jnp.float32)
    lbl = lbl + b_tl_ref[...].astype(jnp.float32)
    m2 = jnp.max(lbl, axis=-1, keepdims=True)
    e2 = jnp.exp(lbl - m2)
    probs = e2 * pl.reciprocal(jnp.sum(e2, axis=-1, keepdims=True),
                               approx=False)

    # ---- Single lane-dense store: [score | probs | zeros] -> [TM, 128]
    pad = jnp.zeros((score.shape[0], out_ref.shape[-1] - 1 - l), jnp.float32)
    out_ref[...] = jnp.concatenate([score, probs, pad],
                                   axis=-1).astype(out_ref.dtype)


def _choose_tm(B, E, in_itemsize, out_itemsize, sublane, weight_bytes):
    """Largest batch tile that fits the VMEM budget, then split for megacore."""
    # Per-row footprint: 2 inputs x double-buffer + output slab x double-buffer.
    per_row = 2 * 2 * E * in_itemsize + 2 * LANE * out_itemsize
    budget = max(VMEM_TILE_BUDGET - 2 * weight_bytes, per_row * sublane)
    tm = _round_down(budget // per_row, sublane)
    tm = max(sublane, min(tm, TM_MAX, _round_up(B, sublane)))
    # v7x megacore: guarantee >= 2 grid steps on the "parallel" batch axis
    # whenever the batch can be split (no-op on single-TC v5e/v6e).
    if pl.cdiv(B, tm) < 2 and B > sublane:
        tm = max(sublane, _round_up(pl.cdiv(B, 2), sublane))
    return tm


def ntm_forward(ngram_emb, doc_emb, params, out_dtype=jnp.float32):
    """Classification-mode (regression_mode=False) forward pass.

    Pass bf16 activations/weights to halve the dominant HBM read; MXU
    accumulation and all post-matmul elementwise math stay f32.
    """
    B, E = ngram_emb.shape
    T, L = params["w_tl"].shape

    in_itemsize = jnp.dtype(ngram_emb.dtype).itemsize
    out_itemsize = jnp.dtype(out_dtype).itemsize
    w_itemsize = jnp.dtype(params["w_nt"].dtype).itemsize
    weight_bytes = w_itemsize * (2 * E * T + 2 * T + T * L + L)

    sublane = max(_sublane(ngram_emb.dtype), _sublane(out_dtype))
    TM = _choose_tm(B, E, in_itemsize, out_itemsize, sublane, weight_bytes)
    grid = (pl.cdiv(B, TM),)   # ragged last tile handled by Pallas (no jnp.pad)

    cost = pl.CostEstimate(
        flops=2 * B * E * T * 2 + 2 * B * T * L,
        transcendentals=B * (2 * T + L),
        bytes_accessed=(in_itemsize * 2 * B * E
                        + weight_bytes
                        + out_itemsize * B * LANE),
    )

    out = pl.pallas_call(
        ntm_kernel,
        out_shape=jax.ShapeDtypeStruct((B, LANE), out_dtype),
        grid=grid,
        in_specs=[
            pl.BlockSpec((TM, E), lambda i: (i, 0)),   # ngram tile
            pl.BlockSpec((TM, E), lambda i: (i, 0)),   # document tile
            pl.BlockSpec((E, T), lambda i: (0, 0)),    # ngram->topic W (resident)
            pl.BlockSpec((1, T), lambda i: (0, 0)),    # ngram->topic b
            pl.BlockSpec((E, T), lambda i: (0, 0)),    # document->topic W (resident)
            pl.BlockSpec((1, T), lambda i: (0, 0)),    # document->topic b
            pl.BlockSpec((T, L), lambda i: (0, 0)),    # topic->label W (resident)
            pl.BlockSpec((1, L), lambda i: (0, 0)),    # topic->label b
        ],
        out_specs=pl.BlockSpec((TM, LANE), lambda i: (i, 0)),
        compiler_params=pltpu.CompilerParams(
            dimension_semantics=("parallel",),         # megacore split on v7x
            vmem_limit_bytes=VMEM_LIMIT_BYTES,
        ),
        cost_estimate=cost,
    )(ngram_emb, doc_emb,
      params["w_nt"], params["b_nt"], params["w_dt"], params["b_dt"],
      params["w_tl"], params["b_tl"])

    score = out[:, 0]
    probs = out[:, 1:1 + L]
    return score, probs


def init_params(key, embedding_dim, topic_dim, num_labels):
    """Deterministic init mimicking nn.Linear (uniform +-1/sqrt(fan_in)).
    Weights stored [in, out] (transpose of PyTorch layout)."""
    ks = jax.random.split(key, 6)

    def lin(kw, kb, fan_in, fan_out):
        bound = 1.0 / jnp.sqrt(fan_in)
        w = jax.random.uniform(kw, (fan_in, fan_out), jnp.float32, -bound, bound)
        b = jax.random.uniform(kb, (1, fan_out), jnp.float32, -bound, bound)
        return w, b

    w_nt, b_nt = lin(ks[0], ks[1], embedding_dim, topic_dim)
    w_dt, b_dt = lin(ks[2], ks[3], embedding_dim, topic_dim)
    w_tl, b_tl = lin(ks[4], ks[5], topic_dim, num_labels)
    return dict(w_nt=w_nt, b_nt=b_nt, w_dt=w_dt, b_dt=b_dt,
                w_tl=w_tl, b_tl=b_tl)


def ntm_reference(ngram_emb, doc_emb, params):
    nt = jax.nn.sigmoid(ngram_emb @ params["w_nt"] + params["b_nt"])
    dt = jax.nn.softmax(doc_emb @ params["w_dt"] + params["b_dt"], axis=-1)
    score = jnp.sum(nt * dt, axis=-1)
    probs = jax.nn.softmax(dt @ params["w_tl"] + params["b_tl"], axis=-1)
    return score, probs


if __name__ == "__main__":
    B, E, T, L = 2, 32, 16, 10     # batch, embedding_dim, topic_dim, num_labels

    key = jax.random.PRNGKey(0)
    k_ng, k_doc, k_params = jax.random.split(key, 3)

    ngram_emb = jax.random.normal(k_ng, (B, E), jnp.float32)
    doc_emb = jax.random.normal(k_doc, (B, E), jnp.float32)
    params = init_params(k_params, E, T, L)

    # f32 path: exact comparison against the pure-JAX reference.
    score, probs = jax.jit(ntm_forward)(ngram_emb, doc_emb, params)
    jax.block_until_ready((score, probs))

    score_ref, probs_ref = ntm_reference(ngram_emb, doc_emb, params)
    assert score.shape == (B,) and probs.shape == (B, L)
    assert jnp.allclose(score, score_ref, atol=1e-5, rtol=1e-5)
    assert jnp.allclose(probs, probs_ref, atol=1e-5, rtol=1e-5)

    # bf16 fast path (halved HBM traffic): loose comparison.
    params_bf16 = jax.tree_util.tree_map(
        lambda a: a.astype(jnp.bfloat16), params)
    fwd_bf16 = jax.jit(functools.partial(ntm_forward, out_dtype=jnp.bfloat16))
    score_bf, probs_bf = fwd_bf16(ngram_emb.astype(jnp.bfloat16),
                                  doc_emb.astype(jnp.bfloat16), params_bf16)
    jax.block_until_ready((score_bf, probs_bf))
    assert jnp.allclose(score_bf.astype(jnp.float32), score_ref, atol=5e-2)
    assert jnp.allclose(probs_bf.astype(jnp.float32), probs_ref, atol=5e-2)

    print("KERNEL_OK")
</pallas_src>

<mosaic_0001>
module attributes {stable_mosaic.version = 11 : i64} {
  func.func @ntm_kernel(%arg0: i32, %arg1: memref<8x32xf32, #tpu.memory_space<vmem>>, %arg2: memref<8x32xf32, #tpu.memory_space<vmem>>, %arg3: memref<32x16xf32, #tpu.memory_space<vmem>>, %arg4: memref<1x16xf32, #tpu.memory_space<vmem>>, %arg5: memref<32x16xf32, #tpu.memory_space<vmem>>, %arg6: memref<1x16xf32, #tpu.memory_space<vmem>>, %arg7: memref<16x10xf32, #tpu.memory_space<vmem>>, %arg8: memref<1x10xf32, #tpu.memory_space<vmem>>, %arg9: memref<8x128xf32, #tpu.memory_space<vmem>>) attributes {dimension_semantics = [#tpu.dimension_semantics<parallel>], iteration_bounds = array<i64: 1>, scalar_prefetch = 0 : i64, scratch_operands = 0 : i64, tpu.core_type = #tpu.core_type<tc>, window_params = [{transform_indices = @transform_0, window_bounds = array<i64: 8, 32>}, {transform_indices = @transform_1, window_bounds = array<i64: 8, 32>}, {pipeline_mode = #tpu.pipeline_mode<synchronous>, transform_indices = @transform_2, window_bounds = array<i64: 32, 16>}, {pipeline_mode = #tpu.pipeline_mode<synchronous>, transform_indices = @transform_3, window_bounds = array<i64: 1, 16>}, {pipeline_mode = #tpu.pipeline_mode<synchronous>, transform_indices = @transform_4, window_bounds = array<i64: 32, 16>}, {pipeline_mode = #tpu.pipeline_mode<synchronous>, transform_indices = @transform_5, window_bounds = array<i64: 1, 16>}, {pipeline_mode = #tpu.pipeline_mode<synchronous>, transform_indices = @transform_6, window_bounds = array<i64: 16, 10>}, {pipeline_mode = #tpu.pipeline_mode<synchronous>, transform_indices = @transform_7, window_bounds = array<i64: 1, 10>}, {transform_indices = @transform_8, window_bounds = array<i64: 8, 128>}]} {
    %c0 = arith.constant 0 : index
    %c0_0 = arith.constant 0 : index
    %0 = vector.load %arg1[%c0, %c0_0] : memref<8x32xf32, #tpu.memory_space<vmem>>, vector<8x32xf32>
    %c0_1 = arith.constant 0 : index
    %c0_2 = arith.constant 0 : index
    %1 = vector.load %arg3[%c0_1, %c0_2] : memref<32x16xf32, #tpu.memory_space<vmem>>, vector<32x16xf32>
    %cst = arith.constant dense<0.000000e+00> : vector<8x16xf32>
    %2 = tpu.matmul %0, %1, %cst {dimension_numbers = #tpu.dot_dimension_numbers<[1], [0], [0], [1], [0, 0, 1, 1], [], []>} : vector<8x32xf32>, vector<32x16xf32>, vector<8x16xf32> -> vector<8x16xf32>
    %c0_3 = arith.constant 0 : index
    %c0_4 = arith.constant 0 : index
    %3 = vector.load %arg4[%c0_3, %c0_4] : memref<1x16xf32, #tpu.memory_space<vmem>>, vector<1x16xf32>
    %4 = vector.broadcast %3 : vector<1x16xf32> to vector<8x16xf32>
    %5 = arith.addf %2, %4 : vector<8x16xf32>
    %c0_5 = arith.constant 0 : index
    %c0_6 = arith.constant 0 : index
    %6 = vector.load %arg2[%c0_5, %c0_6] : memref<8x32xf32, #tpu.memory_space<vmem>>, vector<8x32xf32>
    %c0_7 = arith.constant 0 : index
    %c0_8 = arith.constant 0 : index
    %7 = vector.load %arg5[%c0_7, %c0_8] : memref<32x16xf32, #tpu.memory_space<vmem>>, vector<32x16xf32>
    %cst_9 = arith.constant dense<0.000000e+00> : vector<8x16xf32>
    %8 = tpu.matmul %6, %7, %cst_9 {dimension_numbers = #tpu.dot_dimension_numbers<[1], [0], [0], [1], [0, 0, 1, 1], [], []>} : vector<8x32xf32>, vector<32x16xf32>, vector<8x16xf32> -> vector<8x16xf32>
    %c0_10 = arith.constant 0 : index
    %c0_11 = arith.constant 0 : index
    %9 = vector.load %arg6[%c0_10, %c0_11] : memref<1x16xf32, #tpu.memory_space<vmem>>, vector<1x16xf32>
    %10 = vector.broadcast %9 : vector<1x16xf32> to vector<8x16xf32>
    %11 = arith.addf %8, %10 : vector<8x16xf32>
    %cst_12 = arith.constant 0.000000e+00 : f32
    %12 = vector.broadcast %cst_12 : f32 to vector<8x16xf32>
    %13 = arith.subf %12, %5 : vector<8x16xf32>
    %14 = math.exp %13 : vector<8x16xf32>
    %cst_13 = arith.constant 1.000000e+00 : f32
    %15 = vector.broadcast %cst_13 : f32 to vector<8x16xf32>
    %16 = arith.addf %15, %14 : vector<8x16xf32>
    %17 = tpu.reciprocal %16 : vector<8x16xf32> -> vector<8x16xf32>
    %cst_14 = arith.constant dense<0xFF800000> : vector<8xf32>
    %18 = vector.multi_reduction <maximumf>, %11, %cst_14 [1] : vector<8x16xf32> to vector<8xf32>
    %19 = vector.shape_cast %18 : vector<8xf32> to vector<8x1xf32>
    %20 = vector.broadcast %19 : vector<8x1xf32> to vector<8x16xf32>
    %21 = arith.subf %11, %20 : vector<8x16xf32>
    %22 = math.exp %21 : vector<8x16xf32>
    %cst_15 = arith.constant dense<0.000000e+00> : vector<8xf32>
    %23 = vector.multi_reduction <add>, %22, %cst_15 [1] : vector<8x16xf32> to vector<8xf32>
    %24 = vector.shape_cast %23 : vector<8xf32> to vector<8x1xf32>
    %25 = tpu.reciprocal %24 : vector<8x1xf32> -> vector<8x1xf32>
    %26 = vector.broadcast %25 : vector<8x1xf32> to vector<8x16xf32>
    %27 = arith.mulf %22, %26 : vector<8x16xf32>
    %28 = arith.mulf %17, %27 : vector<8x16xf32>
    %cst_16 = arith.constant dense<0.000000e+00> : vector<8xf32>
    %29 = vector.multi_reduction <add>, %28, %cst_16 [1] : vector<8x16xf32> to vector<8xf32>
    %30 = vector.shape_cast %29 : vector<8xf32> to vector<8x1xf32>
    %c0_17 = arith.constant 0 : index
    %c0_18 = arith.constant 0 : index
    %31 = vector.load %arg7[%c0_17, %c0_18] : memref<16x10xf32, #tpu.memory_space<vmem>>, vector<16x10xf32>
    %cst_19 = arith.constant dense<0.000000e+00> : vector<8x10xf32>
    %32 = tpu.matmul %27, %31, %cst_19 {dimension_numbers = #tpu.dot_dimension_numbers<[1], [0], [0], [1], [0, 0, 1, 1], [], []>} : vector<8x16xf32>, vector<16x10xf32>, vector<8x10xf32> -> vector<8x10xf32>
    %c0_20 = arith.constant 0 : index
    %c0_21 = arith.constant 0 : index
    %33 = vector.load %arg8[%c0_20, %c0_21] : memref<1x10xf32, #tpu.memory_space<vmem>>, vector<1x10xf32>
    %34 = vector.broadcast %33 : vector<1x10xf32> to vector<8x10xf32>
    %35 = arith.addf %32, %34 : vector<8x10xf32>
    %cst_22 = arith.constant dense<0xFF800000> : vector<8xf32>
    %36 = vector.multi_reduction <maximumf>, %35, %cst_22 [1] : vector<8x10xf32> to vector<8xf32>
    %37 = vector.shape_cast %36 : vector<8xf32> to vector<8x1xf32>
    %38 = vector.broadcast %37 : vector<8x1xf32> to vector<8x10xf32>
    %39 = arith.subf %35, %38 : vector<8x10xf32>
    %40 = math.exp %39 : vector<8x10xf32>
    %cst_23 = arith.constant dense<0.000000e+00> : vector<8xf32>
    %41 = vector.multi_reduction <add>, %40, %cst_23 [1] : vector<8x10xf32> to vector<8xf32>
    %42 = vector.shape_cast %41 : vector<8xf32> to vector<8x1xf32>
    %43 = tpu.reciprocal %42 : vector<8x1xf32> -> vector<8x1xf32>
    %44 = vector.broadcast %43 : vector<8x1xf32> to vector<8x10xf32>
    %45 = arith.mulf %40, %44 : vector<8x10xf32>
    %cst_24 = arith.constant 0.000000e+00 : f32
    %46 = vector.broadcast %cst_24 : f32 to vector<8x117xf32>
    %47 = tpu.concatenate %30, %45, %46 in 1 : vector<8x1xf32>, vector<8x10xf32>, vector<8x117xf32> -> vector<8x128xf32>
    %c0_25 = arith.constant 0 : index
    %c0_26 = arith.constant 0 : index
    %48 = vector.load %arg9[%c0_25, %c0_26] : memref<8x128xf32, #tpu.memory_space<vmem>>, vector<8x128xf32>
    tpu.vector_store %arg9[%c0_25, %c0_26], %47 {strides = array<i32>} : memref<8x128xf32, #tpu.memory_space<vmem>>, vector<8x128xf32>,
    return
  }
  func.func @transform_0(%arg0: i32) -> (i32, i32) {
    %c0_i32 = arith.constant 0 : i32
    %c0_i32_0 = arith.constant 0 : i32
    return %arg0, %c0_i32 : i32, i32
  }
  func.func @transform_1(%arg0: i32) -> (i32, i32) {
    %c0_i32 = arith.constant 0 : i32
    %c0_i32_0 = arith.constant 0 : i32
    return %arg0, %c0_i32 : i32, i32
  }
  func.func @transform_2(%arg0: i32) -> (i32, i32) {
    %c0_i32 = arith.constant 0 : i32
    %c0_i32_0 = arith.constant 0 : i32
    %c0_i32_1 = arith.constant 0 : i32
    return %c0_i32, %c0_i32_0 : i32, i32
  }
  func.func @transform_3(%arg0: i32) -> (i32, i32) {
    %c0_i32 = arith.constant 0 : i32
    %c0_i32_0 = arith.constant 0 : i32
    %c0_i32_1 = arith.constant 0 : i32
    return %c0_i32, %c0_i32_0 : i32, i32
  }
  func.func @transform_4(%arg0: i32) -> (i32, i32) {
    %c0_i32 = arith.constant 0 : i32
    %c0_i32_0 = arith.constant 0 : i32
    %c0_i32_1 = arith.constant 0 : i32
    return %c0_i32, %c0_i32_0 : i32, i32
  }
  func.func @transform_5(%arg0: i32) -> (i32, i32) {
    %c0_i32 = arith.constant 0 : i32
    %c0_i32_0 = arith.constant 0 : i32
    %c0_i32_1 = arith.constant 0 : i32
    return %c0_i32, %c0_i32_0 : i32, i32
  }
  func.func @transform_6(%arg0: i32) -> (i32, i32) {
    %c0_i32 = arith.constant 0 : i32
    %c0_i32_0 = arith.constant 0 : i32
    %c0_i32_1 = arith.constant 0 : i32
    return %c0_i32, %c0_i32_0 : i32, i32
  }
  func.func @transform_7(%arg0: i32) -> (i32, i32) {
    %c0_i32 = arith.constant 0 : i32
    %c0_i32_0 = arith.constant 0 : i32
    %c0_i32_1 = arith.constant 0 : i32
    return %c0_i32, %c0_i32_0 : i32, i32
  }
  func.func @transform_8(%arg0: i32) -> (i32, i32) {
    %c0_i32 = arith.constant 0 : i32
    %c0_i32_0 = arith.constant 0 : i32
    return %arg0, %c0_i32 : i32, i32
  }
}

</mosaic_0001>

<llo_original>
// kernel: ntm_forward.1
$region0: #{ntm_forward.1}
  #allocation0 [shape = 'u32[]', space=smem, size = 0x4, offset = 0x4, fixed_abs, tag = 'smem constant byte address 0x4 - core index']
  #allocation1 [shape = 'u32[144,128]{1,0:T(1,128)}', space=vmem, size = 0x12000, scoped, tag = 'internal scratch']
  %s0 = inlined_call_operand.vmem [shape: f32[2,32], index: 0, kind: input, shape index: {}]
  %s1 = inlined_call_operand.vmem [shape: f32[2,32], index: 1, kind: input, shape index: {}]
  %s2 = inlined_call_operand.vmem [shape: f32[32,16], index: 2, kind: input, shape index: {}]
  %s3 = inlined_call_operand.vmem [shape: f32[1,16], index: 3, kind: input, shape index: {}]
  %s4 = inlined_call_operand.vmem [shape: f32[32,16], index: 4, kind: input, shape index: {}]
  %s5 = inlined_call_operand.vmem [shape: f32[1,16], index: 5, kind: input, shape index: {}]
  %s6 = inlined_call_operand.vmem [shape: f32[16,10], index: 6, kind: input, shape index: {}]
  %s7 = inlined_call_operand.vmem [shape: f32[1,10], index: 7, kind: input, shape index: {}]
  %s8 = inlined_call_operand.vmem [shape: f32[2,128], index: 8, kind: output, shape index: {}]
  %s9 = sld [smem:[#allocation0]]
  $region72: #{ntm_forward.1} parent=0
    _
  %s11 = ssub.s32 1, %s9
  %s12 = scalar_select 0, %s11, %s9
  $region1: #{ntm_forward.1} parent=0
    #allocation2 [shape = 'u8[4096]{0}', space=vmem, size = 0x1000, scoped, tag = 'output window, operand 0, single buffered']
    // Predicated region
    $region2: #{ntm_forward.1} parent=1 // pred_check
      _
    $region3: #{ntm_forward.1} parent=1 // pred_check_branch
      %14 = sbr.rel (0) target = $region5
    $region4: #{ntm_forward.1} parent=1 // pred_region
      _
    $region5: #{ntm_forward.1} parent=1 // pred_fallthru
      _
    // Predicated region
    $region6: #{ntm_forward.1} parent=1 // pred_check
      _
    $region7: #{ntm_forward.1} parent=1 // pred_check_branch
      %16 = sbr.rel (0) target = $region9
    $region8: #{ntm_forward.1} parent=1 // pred_region
      _
    $region9: #{ntm_forward.1} parent=1 // pred_fallthru
      _
    // Predicated region
    $region10: #{ntm_forward.1} parent=1 // pred_check
      _
    $region11: #{ntm_forward.1} parent=1 // pred_check_branch
      %18 = sbr.rel (0) target = $region13
    $region12: #{ntm_forward.1} parent=1 // pred_region
      _
    $region13: #{ntm_forward.1} parent=1 // pred_fallthru
      _
    // Predicated region
    $region14: #{ntm_forward.1} parent=1 // pred_check
      _
    $region15: #{ntm_forward.1} parent=1 // pred_check_branch
      %20 = sbr.rel (0) target = $region17
    $region16: #{ntm_forward.1} parent=1 // pred_region
      _
    $region17: #{ntm_forward.1} parent=1 // pred_fallthru
      _
    // Predicated region
    $region18: #{ntm_forward.1} parent=1 // pred_check
      _
    $region19: #{ntm_forward.1} parent=1 // pred_check_branch
      %22 = sbr.rel (0) target = $region21
    $region20: #{ntm_forward.1} parent=1 // pred_region
      _
    $region21: #{ntm_forward.1} parent=1 // pred_fallthru
      _
    // Predicated region
    $region22: #{ntm_forward.1} parent=1 // pred_check
      _
    $region23: #{ntm_forward.1} parent=1 // pred_check_branch
      %24 = sbr.rel (0) target = $region25
    $region24: #{ntm_forward.1} parent=1 // pred_region
      _
    $region25: #{ntm_forward.1} parent=1 // pred_fallthru
      _
    // Predicated region
    $region26: #{ntm_forward.1} parent=1 // pred_check
      _
    $region27: #{ntm_forward.1} parent=1 // pred_check_branch
      %26 = sbr.rel (0) target = $region29
    $region28: #{ntm_forward.1} parent=1 // pred_region
      _
    $region29: #{ntm_forward.1} parent=1 // pred_fallthru
      _
    // Predicated region
    $region30: #{ntm_forward.1} parent=1 // pred_check
      _
    $region31: #{ntm_forward.1} parent=1 // pred_check_branch
      %28 = sbr.rel (0) target = $region33
    $region32: #{ntm_forward.1} parent=1 // pred_region
      _
    $region33: #{ntm_forward.1} parent=1 // pred_fallthru
      _
    %v29 = vld [vmem:[%s0] sm:$0xff]
    %v30 = vld [vmem:[%s2] sm:$0xff]
    %v31 = vld [vmem:[%s2 + $0x8] sm:$0xff]
    %v32 = vld [vmem:[%s2 + $0x10] sm:$0xff]
    %v33 = vld [vmem:[%s2 + $0x18] sm:$0xff]
    %v34 = vld [vmem:[%s3] sm:$0x1]
    %v36 = vlaneseq
    %v37 = vshrl.u32 %v36, 7
    %v38 = vsub.s32 0, %v37
    %v39 = vrot.slane %v34, %v38
    %vm41 = vcmask 261120
    %v43 = vsel %vm41, %v29, 0
    %45 = vmatprep.subr.mxu0 0.0
    %46 = vmatpush1.msra.mxu0 0.0
    %47 = vmatprep.subr.mxu0 0.0
    %48 = vmatpush1.msra.mxu0 0.0
    %49 = vmatprep.subr.mxu0 0.0
    %50 = vmatpush1.msra.mxu0 0.0
    %51 = vmatprep.subr.mxu0 0.0
    %52 = vmatpush1.msra.mxu0 0.0
    %53 = vmatprep.subr.mxu0 0.0
    %54 = vmatpush1.msra.mxu0 0.0
    %55 = vmatprep.subr.mxu0 0.0
    %56 = vmatpush1.msra.mxu0 0.0
    %57 = vmatprep.subr.mxu0 0.0
    %58 = vmatpush1.msra.mxu0 0.0
    %59 = vmatprep.subr.mxu0 0.0
    %60 = vmatpush1.msra.mxu0 0.0
    %61 = vmatprep.subr.mxu0 0.0
    %62 = vmatpush1.msra.mxu0 0.0
    %63 = vmatprep.subr.mxu0 0.0
    %64 = vmatpush1.msra.mxu0 0.0
    %65 = vmatprep.subr.mxu0 0.0
    %66 = vmatpush1.msra.mxu0 0.0
    %67 = vmatprep.subr.mxu0 0.0
    %68 = vmatpush1.msra.mxu0 0.0
    %69 = vmatprep.subr.mxu0 0.0
    %70 = vmatpush1.msra.mxu0 %v33
    %71 = vmatprep.subr.mxu0 0.0
    %72 = vmatpush1.msra.mxu0 %v32
    %73 = vmatprep.subr.mxu0 0.0
    %74 = vmatpush1.msra.mxu0 %v31
    %75 = vmatprep.subr.mxu0 0.0
    %76 = vmatpush1.msra.mxu0 %v30
    %77 = vmatprep.subr.mxu0 0.0
    %78 = vmatpush2.msra.mxu0 0.0
    %79 = vmatprep.subr.mxu0 0.0
    %80 = vmatpush2.msra.mxu0 0.0
    %81 = vmatprep.subr.mxu0 0.0
    %82 = vmatpush2.msra.mxu0 0.0
    %83 = vmatprep.subr.mxu0 0.0
    %84 = vmatpush2.msra.mxu0 0.0
    %85 = vmatprep.subr.mxu0 0.0
    %86 = vmatpush2.msra.mxu0 0.0
    %87 = vmatprep.subr.mxu0 0.0
    %88 = vmatpush2.msra.mxu0 0.0
    %89 = vmatprep.subr.mxu0 0.0
    %90 = vmatpush2.msra.mxu0 0.0
    %91 = vmatprep.subr.mxu0 0.0
    %92 = vmatpush2.msra.mxu0 0.0
    %93 = vmatprep.subr.mxu0 0.0
    %94 = vmatpush2.msra.mxu0 0.0
    %95 = vmatprep.subr.mxu0 0.0
    %96 = vmatpush2.msra.mxu0 0.0
    %97 = vmatprep.subr.mxu0 0.0
    %98 = vmatpush2.msra.mxu0 0.0
    %99 = vmatprep.subr.mxu0 0.0
    %100 = vmatpush2.msra.mxu0 0.0
    %101 = vmatprep.subr.mxu0 0.0
    %102 = vmatpush2.msra.mxu0 0.0
    %103 = vmatprep.subr.mxu0 0.0
    %104 = vmatpush2.msra.mxu0 0.0
    %105 = vmatprep.subr.mxu0 0.0
    %106 = vmatpush2.msra.mxu0 0.0
    %107 = vmatprep.subr.mxu0 0.0
    %108 = vmatpush2.msra.mxu0 0.0
    %109 = vmatprep.mubr.f32.mxu0 0.0
    %110 = vmatmul.mubr.f32.gmra.mxu0 %v43
    %v111 = vpop.f32.mrf.mxu0
    %v112 = vadd.f32 %v39, %v111
    %v113 = vpop.f32.mrf.mxu0
    %114 = vdwg.mxu0
    %v115 = vld [vmem:[%s1] sm:$0xff]
    %v116 = vld [vmem:[%s4] sm:$0xff]
    %v117 = vld [vmem:[%s4 + $0x8] sm:$0xff]
    %v118 = vld [vmem:[%s4 + $0x10] sm:$0xff]
    %v119 = vld [vmem:[%s4 + $0x18] sm:$0xff]
    %v120 = vld [vmem:[%s5] sm:$0x1]
    %v122 = vlaneseq
    %v123 = vshrl.u32 %v122, 7
    %v124 = vsub.s32 0, %v123
    %v125 = vrot.slane %v120, %v124
    %v128 = vsel %vm41, %v115, 0
    %130 = vmatprep.subr.mxu0 0.0
    %131 = vmatpush1.msra.mxu0 0.0
    %132 = vmatprep.subr.mxu0 0.0
    %133 = vmatpush1.msra.mxu0 0.0
    %134 = vmatprep.subr.mxu0 0.0
    %135 = vmatpush1.msra.mxu0 0.0
    %136 = vmatprep.subr.mxu0 0.0
    %137 = vmatpush1.msra.mxu0 0.0
    %138 = vmatprep.subr.mxu0 0.0
    %139 = vmatpush1.msra.mxu0 0.0
    %140 = vmatprep.subr.mxu0 0.0
    %141 = vmatpush1.msra.mxu0 0.0
    %142 = vmatprep.subr.mxu0 0.0
    %143 = vmatpush1.msra.mxu0 0.0
    %144 = vmatprep.subr.mxu0 0.0
    %145 = vmatpush1.msra.mxu0 0.0
    %146 = vmatprep.subr.mxu0 0.0
    %147 = vmatpush1.msra.mxu0 0.0
    %148 = vmatprep.subr.mxu0 0.0
    %149 = vmatpush1.msra.mxu0 0.0
    %150 = vmatprep.subr.mxu0 0.0
    %151 = vmatpush1.msra.mxu0 0.0
    %152 = vmatprep.subr.mxu0 0.0
    %153 = vmatpush1.msra.mxu0 0.0
    %154 = vmatprep.subr.mxu0 0.0
    %155 = vmatpush1.msra.mxu0 %v119
    %156 = vmatprep.subr.mxu0 0.0
    %157 = vmatpush1.msra.mxu0 %v118
    %158 = vmatprep.subr.mxu0 0.0
    %159 = vmatpush1.msra.mxu0 %v117
    %160 = vmatprep.subr.mxu0 0.0
    %161 = vmatpush1.msra.mxu0 %v116
    %162 = vmatprep.subr.mxu0 0.0
    %163 = vmatpush2.msra.mxu0 0.0
    %164 = vmatprep.subr.mxu0 0.0
    %165 = vmatpush2.msra.mxu0 0.0
    %166 = vmatprep.subr.mxu0 0.0
    %167 = vmatpush2.msra.mxu0 0.0
    %168 = vmatprep.subr.mxu0 0.0
    %169 = vmatpush2.msra.mxu0 0.0
    %170 = vmatprep.subr.mxu0 0.0
    %171 = vmatpush2.msra.mxu0 0.0
    %172 = vmatprep.subr.mxu0 0.0
    %173 = vmatpush2.msra.mxu0 0.0
    %174 = vmatprep.subr.mxu0 0.0
    %175 = vmatpush2.msra.mxu0 0.0
    %176 = vmatprep.subr.mxu0 0.0
    %177 = vmatpush2.msra.mxu0 0.0
    %178 = vmatprep.subr.mxu0 0.0
    %179 = vmatpush2.msra.mxu0 0.0
    %180 = vmatprep.subr.mxu0 0.0
    %181 = vmatpush2.msra.mxu0 0.0
    %182 = vmatprep.subr.mxu0 0.0
    %183 = vmatpush2.msra.mxu0 0.0
    %184 = vmatprep.subr.mxu0 0.0
    %185 = vmatpush2.msra.mxu0 0.0
    %186 = vmatprep.subr.mxu0 0.0
    %187 = vmatpush2.msra.mxu0 0.0
    %188 = vmatprep.subr.mxu0 0.0
    %189 = vmatpush2.msra.mxu0 0.0
    %190 = vmatprep.subr.mxu0 0.0
    %191 = vmatpush2.msra.mxu0 0.0
    %192 = vmatprep.subr.mxu0 0.0
    %193 = vmatpush2.msra.mxu0 0.0
    %194 = vmatprep.mubr.f32.mxu0 0.0
    %195 = vmatmul.mubr.f32.gmra.mxu0 %v128
    %v196 = vpop.f32.mrf.mxu0
    %v197 = vadd.f32 %v125, %v196
    %v198 = vpop.f32.mrf.mxu0
    %199 = vdwg.mxu0
    %v200 = vsub.f32 0.0, %v112
    %v201 = vmul.f32 %v200, 1.442695
    %v202 = vpow.pop %v201
    %v203 = vadd.f32 %v202, 1.0
    %v204 = vrcp.pop %v203
    %vm205 = vcmask 130048
    %v206 = vsel %vm205, %v197, -inf
    %207 = vmax.xlane.f32.xlu0 %v206
    %v208 = vpop.xlane.xlu0 %207
    %v209 = vsub.f32 %v197, %v208
    %v210 = vmul.f32 %v209, 1.442695
    %v211 = vpow.pop %v210
    %v212 = vsel %vm205, %v211, 0.0
    %213 = vadd.xlane.f32.xlu0 %v212
    %v214 = vpop.xlane.xlu0 %213
    %v215 = vrcp.pop %v214
    %v216 = vmul.f32 %v211, %v215
    %v217 = vmul.f32 %v204, %v216
    %v218 = vsel %vm205, %v217, 0.0
    %219 = vadd.xlane.f32.xlu0 %v218
    %v220 = vpop.xlane.xlu0 %219
    %v221 = vld [vmem:[%s6] sm:$0xff]
    %v222 = vld [vmem:[%s6 + $0x8] sm:$0xff]
    %v223 = vld [vmem:[%s7] sm:$0x1]
    %v225 = vlaneseq
    %v226 = vshrl.u32 %v225, 7
    %v227 = vsub.s32 0, %v226
    %v228 = vrot.slane %v223, %v227
    %v231 = vsel %vm205, %v216, 0
    %233 = vmatprep.subr.mxu0 0.0
    %234 = vmatpush1.msra.mxu0 0.0
    %235 = vmatprep.subr.mxu0 0.0
    %236 = vmatpush1.msra.mxu0 0.0
    %237 = vmatprep.subr.mxu0 0.0
    %238 = vmatpush1.msra.mxu0 0.0
    %239 = vmatprep.subr.mxu0 0.0
    %240 = vmatpush1.msra.mxu0 0.0
    %241 = vmatprep.subr.mxu0 0.0
    %242 = vmatpush1.msra.mxu0 0.0
    %243 = vmatprep.subr.mxu0 0.0
    %244 = vmatpush1.msra.mxu0 0.0
    %245 = vmatprep.subr.mxu0 0.0
    %246 = vmatpush1.msra.mxu0 0.0
    %247 = vmatprep.subr.mxu0 0.0
    %248 = vmatpush1.msra.mxu0 0.0
    %249 = vmatprep.subr.mxu0 0.0
    %250 = vmatpush1.msra.mxu0 0.0
    %251 = vmatprep.subr.mxu0 0.0
    %252 = vmatpush1.msra.mxu0 0.0
    %253 = vmatprep.subr.mxu0 0.0
    %254 = vmatpush1.msra.mxu0 0.0
    %255 = vmatprep.subr.mxu0 0.0
    %256 = vmatpush1.msra.mxu0 0.0
    %257 = vmatprep.subr.mxu0 0.0
    %258 = vmatpush1.msra.mxu0 0.0
    %259 = vmatprep.subr.mxu0 0.0
    %260 = vmatpush1.msra.mxu0 0.0
    %261 = vmatprep.subr.mxu0 0.0
    %262 = vmatpush1.msra.mxu0 %v222
    %263 = vmatprep.subr.mxu0 0.0
    %264 = vmatpush1.msra.mxu0 %v221
    %265 = vmatprep.subr.mxu0 0.0
    %266 = vmatpush2.msra.mxu0 0.0
    %267 = vmatprep.subr.mxu0 0.0
    %268 = vmatpush2.msra.mxu0 0.0
    %269 = vmatprep.subr.mxu0 0.0
    %270 = vmatpush2.msra.mxu0 0.0
    %271 = vmatprep.subr.mxu0 0.0
    %272 = vmatpush2.msra.mxu0 0.0
    %273 = vmatprep.subr.mxu0 0.0
    %274 = vmatpush2.msra.mxu0 0.0
    %275 = vmatprep.subr.mxu0 0.0
    %276 = vmatpush2.msra.mxu0 0.0
    %277 = vmatprep.subr.mxu0 0.0
    %278 = vmatpush2.msra.mxu0 0.0
    %279 = vmatprep.subr.mxu0 0.0
    %280 = vmatpush2.msra.mxu0 0.0
    %281 = vmatprep.subr.mxu0 0.0
    %282 = vmatpush2.msra.mxu0 0.0
    %283 = vmatprep.subr.mxu0 0.0
    %284 = vmatpush2.msra.mxu0 0.0
    %285 = vmatprep.subr.mxu0 0.0
    %286 = vmatpush2.msra.mxu0 0.0
    %287 = vmatprep.subr.mxu0 0.0
    %288 = vmatpush2.msra.mxu0 0.0
    %289 = vmatprep.subr.mxu0 0.0
    %290 = vmatpush2.msra.mxu0 0.0
    %291 = vmatprep.subr.mxu0 0.0
    %292 = vmatpush2.msra.mxu0 0.0
    %293 = vmatprep.subr.mxu0 0.0
    %294 = vmatpush2.msra.mxu0 0.0
    %295 = vmatprep.subr.mxu0 0.0
    %296 = vmatpush2.msra.mxu0 0.0
    %297 = vmatprep.mubr.f32.mxu0 0.0
    %298 = vmatmul.mubr.f32.gmra.mxu0 %v231
    %v299 = vpop.f32.mrf.mxu0
    %v300 = vadd.f32 %v228, %v299
    %v301 = vpop.f32.mrf.mxu0
    %302 = vdwg.mxu0
    %vm303 = vcmask 80896
    %v304 = vsel %vm303, %v300, -inf
    %305 = vmax.xlane.f32.xlu0 %v304
    %v306 = vpop.xlane.xlu0 %305
    %v307 = vsub.f32 %v300, %v306
    %v308 = vmul.f32 %v307, 1.442695
    %v309 = vpow.pop %v308
    %v310 = vsel %vm303, %v309, 0.0
    %311 = vadd.xlane.f32.xlu0 %v310
    %v312 = vpop.xlane.xlu0 %311
    %v313 = vrcp.pop %v312
    %v314 = vmul.f32 %v309, %v313
    %316 = vrot.lane.b32.xlu0 %v314, 1
    %v317 = vpop.permute.xlu0 %316
    %vm319 = vcmask 7168
    %v320 = vsel %vm319, %v220, %v317
    %vm321 = vcmask 89088
    %v322 = vsel %vm321, %v320, 0.0
    %323 = vst [vmem:[#allocation2] sm:$0xff] %v322
    // Predicated region
    $region34: #{ntm_forward.1} parent=1 // pred_check
      _
    $region35: #{ntm_forward.1} parent=1 // pred_check_branch
      %325 = sbr.rel (0) target = $region37
    $region36: #{ntm_forward.1} parent=1 // pred_region
      // Predicated region
      $region38: #{ntm_forward.1} parent=36 // pred_check
        _
      $region39: #{ntm_forward.1} parent=36 // pred_check_branch
        %327 = sbr.rel (0) target = $region41
      $region40: #{ntm_forward.1} parent=36 // pred_region
        // Predicated region
        $region42: #{ntm_forward.1} parent=40 // pred_check
          _
        $region43: #{ntm_forward.1} parent=40 // pred_check_branch
          %329 = sbr.rel target = $region45
        $region44: #{ntm_forward.1} parent=40 // pred_region
          // Predicated region
          $region57: #{ntm_forward.1} parent=44 // pred_check
            _
          $region58: #{ntm_forward.1} parent=44 // pred_check_branch
            %345 = sbr.rel (0) target = $region60
          $region59: #{ntm_forward.1} parent=44 // pred_region
            %s347 = ssub.s32 4, 1
            loop: start=0, step=1, limit=1
            $region61: #{ntm_forward.1} parent=59 // loop_pre_header
              _
            $region62: #{ntm_forward.1} parent=59 // loop_header
              %s349 = sphi 0, %s353
              %p350 = scmp.ge.s32.totalorder %s349, 1
              %s354 = sphi [#allocation2], [#allocation2]
              %s355 = sphi %s8, %s8
            $region63: #{ntm_forward.1} parent=59 // loop_header_branch
              %352 = sbr.rel (%p350) target = $region67
            $region64: #{ntm_forward.1} parent=59 // loop_body
              %v356 = vld [vmem:[%s354] sm:%s347]
              %357 = vst [vmem:[%s355] sm:%s347] %v356
            $region65: #{ntm_forward.1} parent=59 // loop_footer
              %s353 = sadd.s32 1, %s349
            $region66: #{ntm_forward.1} parent=59 // loop_footer_branch
              %348 = sbr.rel target = $region62
            $region67: #{ntm_forward.1} parent=59 // loop_exit
              _
          $region60: #{ntm_forward.1} parent=44 // pred_fallthru
            _
        $region45: #{ntm_forward.1} parent=40 // pred_fallthru
          _
        // Predicated region
        $region46: #{ntm_forward.1} parent=40 // pred_check
          _
        $region47: #{ntm_forward.1} parent=40 // pred_check_branch
          %331 = sbr.rel (0) target = $region49
        $region48: #{ntm_forward.1} parent=40 // pred_region
          %s333 = ssub.s32 4, 1
          loop: start=0, step=1, limit=1
          $region50: #{ntm_forward.1} parent=48 // loop_pre_header
            _
          $region51: #{ntm_forward.1} parent=48 // loop_header
            %s335 = sphi 0, %s339
            %p336 = scmp.ge.s32.totalorder %s335, 1
            %s340 = sphi [#allocation2], [#allocation2]
            %s341 = sphi %s8, %s8
          $region52: #{ntm_forward.1} parent=48 // loop_header_branch
            %338 = sbr.rel (%p336) target = $region56
          $region53: #{ntm_forward.1} parent=48 // loop_body
            %v342 = vld [vmem:[%s340] sm:%s333]
            %343 = vst [vmem:[%s341] sm:%s333] %v342
          $region54: #{ntm_forward.1} parent=48 // loop_footer
            %s339 = sadd.s32 1, %s335
          $region55: #{ntm_forward.1} parent=48 // loop_footer_branch
            %334 = sbr.rel target = $region51
          $region56: #{ntm_forward.1} parent=48 // loop_exit
            _
        $region49: #{ntm_forward.1} parent=40 // pred_fallthru
          _
      $region41: #{ntm_forward.1} parent=36 // pred_fallthru
        _
      %358 = vnop
    $region37: #{ntm_forward.1} parent=1 // pred_fallthru
      _
    // Predicated region
    $region68: #{ntm_forward.1} parent=1 // pred_check
      _
    $region69: #{ntm_forward.1} parent=1 // pred_check_branch
      %360 = sbr.rel (0) target = $region71
    $region70: #{ntm_forward.1} parent=1 // pred_region
      _
    $region71: #{ntm_forward.1} parent=1 // pred_fallthru
      _

</llo_original>
